<compile_context>
chip_gen: v7x
topology: tpu7x:2x2x1
jax: 0.10.0
libtpu: 0.0.40
codegen_flags: <defaults>
</compile_context>

<pallas_src>
import functools

import jax
import jax.numpy as jnp
from jax.experimental import pallas as pl
from jax.experimental.pallas import tpu as pltpu


def _conv_folded_kernel(x_ref, w_ref, b_ref, o_ref, *, N, H_pad, H_out, K):
    # x_ref: (N*H_pad, W_pad*C_in)            padded input, rows = (n, h_pad)
    # w_ref: (K, W_pad*C_in, W_out*C_out)     kw/C_in-folded weights
    # b_ref: (1, W_out*C_out)                 bias tiled along W_out
    # o_ref: (N*H_out, W_out*C_out)           lane-dense output slab
    bias = b_ref[...]                              # (1, W_out*C_out)
    for n in range(N):                             # tiny static unroll (N=2)
        # K accumulated MXU dots; acc initialized by the first dot.
        row0 = n * H_pad                           # static offsets
        acc = jnp.dot(
            x_ref[row0:row0 + H_out, :], w_ref[0],
            preferred_element_type=jnp.float32,
        )
        for kh in range(1, K):
            lhs = x_ref[row0 + kh:row0 + kh + H_out, :]   # (H_out, W_pad*C_in)
            acc = acc + jnp.dot(
                lhs, w_ref[kh], preferred_element_type=jnp.float32
            )
        # single bulk, lane-dense store per batch element (last dim multiple
        # of 128 for the example shapes -> unmasked vst on the lane axis)
        o_ref[n * H_out:(n + 1) * H_out, :] = (acc + bias).astype(o_ref.dtype)


def conv2d_circular8(x_nchw, weight_oihw, bias, pad_lrtb, stride=1):
    """Forward pass of Conv2d_Circular8.  x_nchw: (N, C_in, H, W) float32."""
    assert stride == 1  # TODO(synk): general stride (module default is 1)
    left, right, top, bottom = pad_lrtb
    N, C_in, H, W = x_nchw.shape
    C_out, _, K, K2 = weight_oihw.shape
    assert K == K2
    # latent assumptions of the torch module made explicit:
    assert left <= 8 and right <= 8, "wrap pad must not exceed the 8-col slice"
    assert (top == 0 and bottom == 0) or W == 8, "cat needs matching heights"

    # --- glue: circular pad of the first 8 width columns, then concat -------
    circ = x_nchw[:, :, :, 0:8]
    other = x_nchw[:, :, :, 8:]
    circ = jnp.pad(
        circ, ((0, 0), (0, 0), (top, bottom), (left, right)), mode="wrap"
    )  # == torch 'circular' for pad <= dim size
    y = jnp.concatenate([circ, other], axis=-1)       # (N, C_in, H_pad, W_pad)

    # --- glue: NCHW -> NHWC, then flatten (W_pad, C_in) onto the lane axis ---
    x = jnp.transpose(y, (0, 2, 3, 1))                # (N, H_pad, W_pad, C_in)
    _, H_pad, W_pad, _ = x.shape
    H_out = H_pad - K + 1
    W_out = W_pad - K + 1
    x_flat = x.reshape(N * H_pad, W_pad * C_in)

    # --- fold kw taps into the weight matrix (done once, in XLA) ------------
    w_hwio = jnp.transpose(weight_oihw, (2, 3, 1, 0))  # (K, K, C_in, C_out)
    kw_idx = jnp.arange(K)[:, None, None]
    wp_idx = jnp.arange(W_pad)[None, :, None]
    w_idx = jnp.arange(W_out)[None, None, :]
    sel = (wp_idx == w_idx + kw_idx).astype(w_hwio.dtype)   # (K, W_pad, W_out)
    # B[kh, wp, ci, w, c] = sum_kw sel[kw, wp, w] * W[kh, kw, ci, c]
    w_folded = jnp.einsum("kpw,hkic->hpiwc", sel, w_hwio)
    w_folded = w_folded.reshape(K, W_pad * C_in, W_out * C_out)

    # bias tiled to the (w, c) lane layout: b_flat[w*C_out + c] = bias[c]
    b_flat = jnp.tile(bias.astype(x.dtype), W_out).reshape(1, W_out * C_out)

    kernel = functools.partial(
        _conv_folded_kernel, N=N, H_pad=H_pad, H_out=H_out, K=K
    )

    out_flat = pl.pallas_call(
        kernel,
        out_shape=jax.ShapeDtypeStruct((N * H_out, W_out * C_out), x.dtype),
        grid=(1,),  # whole problem (~10 KB) fits VMEM; single pipeline step
        in_specs=[
            pl.BlockSpec((N * H_pad, W_pad * C_in), lambda i: (0, 0)),
            pl.BlockSpec((K, W_pad * C_in, W_out * C_out), lambda i: (0, 0, 0)),
            pl.BlockSpec((1, W_out * C_out), lambda i: (0, 0)),
        ],
        out_specs=pl.BlockSpec((N * H_out, W_out * C_out), lambda i: (0, 0)),
        compiler_params=pltpu.CompilerParams(dimension_semantics=("arbitrary",)),
    )(x_flat, w_folded, b_flat)

    # lane-dense slab -> NCHW to match the PyTorch module's output convention
    out = out_flat.reshape(N, H_out, W_out, C_out)
    return jnp.transpose(out, (0, 3, 1, 2))


if __name__ == "__main__":
    # Module config: Conv2d_Circular8(in=4, out=8, kernel_size=3,
    #                                 pad_LRTB=(1, 1, 0, 0), stride=1, bias=True)
    N, C_in, H, W = 2, 4, 16, 16
    C_out, K = 8, 3
    pad_lrtb = (1, 1, 0, 0)

    key = jax.random.PRNGKey(0)
    kx, kw, kb = jax.random.split(key, 3)

    x = jax.random.normal(kx, (N, C_in, H, W), dtype=jnp.float32)

    # Deterministic Conv2d-style init: U(-1/sqrt(fan_in), 1/sqrt(fan_in))
    fan_in = C_in * K * K
    bound = 1.0 / (fan_in ** 0.5)
    weight = jax.random.uniform(
        kw, (C_out, C_in, K, K), minval=-bound, maxval=bound, dtype=jnp.float32
    )
    bias = jax.random.uniform(
        kb, (C_out,), minval=-bound, maxval=bound, dtype=jnp.float32
    )

    out = conv2d_circular8(x, weight, bias, pad_lrtb)
    out = jax.block_until_ready(out)

    # Reference check with XLA's conv on the identically padded input.
    circ = jnp.pad(x[:, :, :, 0:8], ((0, 0), (0, 0), (0, 0), (1, 1)), mode="wrap")
    y_pad = jnp.concatenate([circ, x[:, :, :, 8:]], axis=-1)
    ref = jax.lax.conv_general_dilated(
        y_pad, weight, window_strides=(1, 1), padding="VALID",
        dimension_numbers=("NCHW", "OIHW", "NCHW"),
    ) + bias.reshape(1, C_out, 1, 1)

    assert out.shape == (N, C_out, H - K + 1, W + 2 - K + 1)
    assert jnp.allclose(out, ref, atol=1e-4, rtol=1e-4)
    print("KERNEL_OK")
</pallas_src>

<mosaic_0001>
module attributes {stable_mosaic.version = 11 : i64} {
  func.func @_conv_folded_kernel(%arg0: i32, %arg1: memref<32x72xf32, #tpu.memory_space<vmem>>, %arg2: memref<3x72x128xf32, #tpu.memory_space<vmem>>, %arg3: memref<1x128xf32, #tpu.memory_space<vmem>>, %arg4: memref<28x128xf32, #tpu.memory_space<vmem>>) attributes {dimension_semantics = [#tpu.dimension_semantics<arbitrary>], iteration_bounds = array<i64: 1>, scalar_prefetch = 0 : i64, scratch_operands = 0 : i64, tpu.core_type = #tpu.core_type<tc>, window_params = [{pipeline_mode = #tpu.pipeline_mode<synchronous>, transform_indices = @transform_0, window_bounds = array<i64: 32, 72>}, {pipeline_mode = #tpu.pipeline_mode<synchronous>, transform_indices = @transform_1, window_bounds = array<i64: 3, 72, 128>}, {pipeline_mode = #tpu.pipeline_mode<synchronous>, transform_indices = @transform_2, window_bounds = array<i64: 1, 128>}, {pipeline_mode = #tpu.pipeline_mode<synchronous>, transform_indices = @transform_3, window_bounds = array<i64: 28, 128>}]} {
    %c0 = arith.constant 0 : index
    %c0_0 = arith.constant 0 : index
    %0 = vector.load %arg3[%c0, %c0_0] : memref<1x128xf32, #tpu.memory_space<vmem>>, vector<1x128xf32>
    %c0_1 = arith.constant 0 : index
    %c0_2 = arith.constant 0 : index
    %1 = vector.load %arg1[%c0_1, %c0_2] : memref<32x72xf32, #tpu.memory_space<vmem>>, vector<14x72xf32>
    %c0_3 = arith.constant 0 : index
    %c0_4 = arith.constant 0 : index
    %c0_5 = arith.constant 0 : index
    %2 = vector.load %arg2[%c0_3, %c0_4, %c0_5] : memref<3x72x128xf32, #tpu.memory_space<vmem>>, vector<1x72x128xf32>
    %3 = vector.shape_cast %2 : vector<1x72x128xf32> to vector<72x128xf32>
    %cst = arith.constant dense<0.000000e+00> : vector<14x128xf32>
    %4 = tpu.matmul %1, %3, %cst {dimension_numbers = #tpu.dot_dimension_numbers<[1], [0], [0], [1], [0, 0, 1, 1], [], []>} : vector<14x72xf32>, vector<72x128xf32>, vector<14x128xf32> -> vector<14x128xf32>
    %c1 = arith.constant 1 : index
    %c0_6 = arith.constant 0 : index
    %5 = vector.load %arg1[%c1, %c0_6] : memref<32x72xf32, #tpu.memory_space<vmem>>, vector<14x72xf32>
    %c1_7 = arith.constant 1 : index
    %c0_8 = arith.constant 0 : index
    %c0_9 = arith.constant 0 : index
    %6 = vector.load %arg2[%c1_7, %c0_8, %c0_9] : memref<3x72x128xf32, #tpu.memory_space<vmem>>, vector<1x72x128xf32>
    %7 = vector.shape_cast %6 : vector<1x72x128xf32> to vector<72x128xf32>
    %cst_10 = arith.constant dense<0.000000e+00> : vector<14x128xf32>
    %8 = tpu.matmul %5, %7, %cst_10 {dimension_numbers = #tpu.dot_dimension_numbers<[1], [0], [0], [1], [0, 0, 1, 1], [], []>} : vector<14x72xf32>, vector<72x128xf32>, vector<14x128xf32> -> vector<14x128xf32>
    %9 = arith.addf %4, %8 : vector<14x128xf32>
    %c2 = arith.constant 2 : index
    %c0_11 = arith.constant 0 : index
    %10 = vector.load %arg1[%c2, %c0_11] : memref<32x72xf32, #tpu.memory_space<vmem>>, vector<14x72xf32>
    %c2_12 = arith.constant 2 : index
    %c0_13 = arith.constant 0 : index
    %c0_14 = arith.constant 0 : index
    %11 = vector.load %arg2[%c2_12, %c0_13, %c0_14] : memref<3x72x128xf32, #tpu.memory_space<vmem>>, vector<1x72x128xf32>
    %12 = vector.shape_cast %11 : vector<1x72x128xf32> to vector<72x128xf32>
    %cst_15 = arith.constant dense<0.000000e+00> : vector<14x128xf32>
    %13 = tpu.matmul %10, %12, %cst_15 {dimension_numbers = #tpu.dot_dimension_numbers<[1], [0], [0], [1], [0, 0, 1, 1], [], []>} : vector<14x72xf32>, vector<72x128xf32>, vector<14x128xf32> -> vector<14x128xf32>
    %14 = arith.addf %9, %13 : vector<14x128xf32>
    %15 = vector.broadcast %0 : vector<1x128xf32> to vector<14x128xf32>
    %16 = arith.addf %14, %15 : vector<14x128xf32>
    %c0_16 = arith.constant 0 : index
    %c0_17 = arith.constant 0 : index
    %17 = vector.load %arg4[%c0_16, %c0_17] : memref<28x128xf32, #tpu.memory_space<vmem>>, vector<14x128xf32>
    tpu.vector_store %arg4[%c0_16, %c0_17], %16 {strides = array<i32>} : memref<28x128xf32, #tpu.memory_space<vmem>>, vector<14x128xf32>,
    %c16 = arith.constant 16 : index
    %c0_18 = arith.constant 0 : index
    %18 = vector.load %arg1[%c16, %c0_18] : memref<32x72xf32, #tpu.memory_space<vmem>>, vector<14x72xf32>
    %c0_19 = arith.constant 0 : index
    %c0_20 = arith.constant 0 : index
    %c0_21 = arith.constant 0 : index
    %19 = vector.load %arg2[%c0_19, %c0_20, %c0_21] : memref<3x72x128xf32, #tpu.memory_space<vmem>>, vector<1x72x128xf32>
    %20 = vector.shape_cast %19 : vector<1x72x128xf32> to vector<72x128xf32>
    %cst_22 = arith.constant dense<0.000000e+00> : vector<14x128xf32>
    %21 = tpu.matmul %18, %20, %cst_22 {dimension_numbers = #tpu.dot_dimension_numbers<[1], [0], [0], [1], [0, 0, 1, 1], [], []>} : vector<14x72xf32>, vector<72x128xf32>, vector<14x128xf32> -> vector<14x128xf32>
    %c17 = arith.constant 17 : index
    %c0_23 = arith.constant 0 : index
    %22 = vector.load %arg1[%c17, %c0_23] : memref<32x72xf32, #tpu.memory_space<vmem>>, vector<14x72xf32>
    %c1_24 = arith.constant 1 : index
    %c0_25 = arith.constant 0 : index
    %c0_26 = arith.constant 0 : index
    %23 = vector.load %arg2[%c1_24, %c0_25, %c0_26] : memref<3x72x128xf32, #tpu.memory_space<vmem>>, vector<1x72x128xf32>
    %24 = vector.shape_cast %23 : vector<1x72x128xf32> to vector<72x128xf32>
    %cst_27 = arith.constant dense<0.000000e+00> : vector<14x128xf32>
    %25 = tpu.matmul %22, %24, %cst_27 {dimension_numbers = #tpu.dot_dimension_numbers<[1], [0], [0], [1], [0, 0, 1, 1], [], []>} : vector<14x72xf32>, vector<72x128xf32>, vector<14x128xf32> -> vector<14x128xf32>
    %26 = arith.addf %21, %25 : vector<14x128xf32>
    %c18 = arith.constant 18 : index
    %c0_28 = arith.constant 0 : index
    %27 = vector.load %arg1[%c18, %c0_28] : memref<32x72xf32, #tpu.memory_space<vmem>>, vector<14x72xf32>
    %c2_29 = arith.constant 2 : index
    %c0_30 = arith.constant 0 : index
    %c0_31 = arith.constant 0 : index
    %28 = vector.load %arg2[%c2_29, %c0_30, %c0_31] : memref<3x72x128xf32, #tpu.memory_space<vmem>>, vector<1x72x128xf32>
    %29 = vector.shape_cast %28 : vector<1x72x128xf32> to vector<72x128xf32>
    %cst_32 = arith.constant dense<0.000000e+00> : vector<14x128xf32>
    %30 = tpu.matmul %27, %29, %cst_32 {dimension_numbers = #tpu.dot_dimension_numbers<[1], [0], [0], [1], [0, 0, 1, 1], [], []>} : vector<14x72xf32>, vector<72x128xf32>, vector<14x128xf32> -> vector<14x128xf32>
    %31 = arith.addf %26, %30 : vector<14x128xf32>
    %32 = vector.broadcast %0 : vector<1x128xf32> to vector<14x128xf32>
    %33 = arith.addf %31, %32 : vector<14x128xf32>
    %c14 = arith.constant 14 : index
    %c0_33 = arith.constant 0 : index
    %34 = vector.load %arg4[%c14, %c0_33] : memref<28x128xf32, #tpu.memory_space<vmem>>, vector<14x128xf32>
    tpu.vector_store %arg4[%c14, %c0_33], %33 {strides = array<i32>} : memref<28x128xf32, #tpu.memory_space<vmem>>, vector<14x128xf32>,
    return
  }
  func.func @transform_0(%arg0: i32) -> (i32, i32) {
    %c0_i32 = arith.constant 0 : i32
    %c0_i32_0 = arith.constant 0 : i32
    %c0_i32_1 = arith.constant 0 : i32
    return %c0_i32, %c0_i32_0 : i32, i32
  }
  func.func @transform_1(%arg0: i32) -> (i32, i32, i32) {
    %c0_i32 = arith.constant 0 : i32
    %c0_i32_0 = arith.constant 0 : i32
    %c0_i32_1 = arith.constant 0 : i32
    %c0_i32_2 = arith.constant 0 : i32
    return %c0_i32, %c0_i32_0, %c0_i32_1 : i32, i32, i32
  }
  func.func @transform_2(%arg0: i32) -> (i32, i32) {
    %c0_i32 = arith.constant 0 : i32
    %c0_i32_0 = arith.constant 0 : i32
    %c0_i32_1 = arith.constant 0 : i32
    return %c0_i32, %c0_i32_0 : i32, i32
  }
  func.func @transform_3(%arg0: i32) -> (i32, i32) {
    %c0_i32 = arith.constant 0 : i32
    %c0_i32_0 = arith.constant 0 : i32
    %c0_i32_1 = arith.constant 0 : i32
    return %c0_i32, %c0_i32_0 : i32, i32
  }
}

</mosaic_0001>

<llo_original>
// kernel: tpu_custom_call.1
$region0: #{tpu_custom_call.1}
  #allocation0 [shape = 'u32[]', space=smem, size = 0x4, offset = 0x4, fixed_abs, tag = 'smem constant byte address 0x4 - core index']
  #allocation1 [shape = 'u32[144,128]{1,0:T(1,128)}', space=vmem, size = 0x12000, scoped, tag = 'internal scratch']
  %s0 = inlined_call_operand.hbm [shape: f32[32,72], index: 0, kind: input, shape index: {}]
  %s1 = inlined_call_operand.hbm [shape: f32[3,72,128], index: 1, kind: input, shape index: {}]
  %s2 = inlined_call_operand.vmem [shape: f32[1,128], index: 2, kind: input, shape index: {}]
  %s3 = inlined_call_operand.hbm [shape: f32[28,128], index: 3, kind: output, shape index: {}]
  %s4 = sld [smem:[#allocation0]]
  $region30: #{tpu_custom_call.1} parent=0
    _
  %s6 = ssub.s32 1, %s4
  %s7 = scalar_select 0, %s6, %s4
  $region1: #{tpu_custom_call.1} parent=0
    #allocation2 [shape = 'u8[16384]{0}', space=vmem, size = 0x4000, scoped, tag = 'input window, operand 0, single buffered']
    #allocation3 [shape = 's32[1]{0}', space=sflag, size = 0x4, scoped, tag = 'scoped memory for tpu_custom_call.1']
    #allocation4 [shape = 's32[1]{0}', space=sflag, size = 0x4, scoped, tag = 'scoped memory for tpu_custom_call.1']
    #allocation5 [shape = 'u8[110592]{0}', space=vmem, size = 0x1b000, scoped, tag = 'input window, operand 1, single buffered']
    #allocation6 [shape = 's32[1]{0}', space=sflag, size = 0x4, scoped, tag = 'scoped memory for tpu_custom_call.1']
    #allocation7 [shape = 'u8[16384]{0}', space=vmem, size = 0x4000, scoped, tag = 'output window, operand 0, single buffered']
    %8 = vsyncpa [#allocation3], 0
    %9 = vsyncpa [#allocation6], 0
    %10 = vsyncpa [#allocation4], 0
    // Predicated region
    $region2: #{tpu_custom_call.1} parent=1 // pred_check
      _
    $region3: #{tpu_custom_call.1} parent=1 // pred_check_branch
      %12 = sbr.rel (0) target = $region5
    $region4: #{tpu_custom_call.1} parent=1 // pred_region
      %s14 = ssub.s32 512, 512
      %15 = vsyncadd [#allocation3], %s14
      %s16 = sshll.u32 [#allocation2], 4
      %s17 = int_to_ptr.vmem [resolvable:$true] %s16
      %22 = dma.hbm_to_vmem [thread:$0]  %s0, 512, %s17, [#allocation3], 128, 128, 8
    $region5: #{tpu_custom_call.1} parent=1 // pred_fallthru
      _
    // Predicated region
    $region6: #{tpu_custom_call.1} parent=1 // pred_check
      _
    $region7: #{tpu_custom_call.1} parent=1 // pred_check_branch
      %24 = sbr.rel (0) target = $region9
    $region8: #{tpu_custom_call.1} parent=1 // pred_region
      %s26 = ssub.s32 3456, 3456
      %27 = vsyncadd [#allocation6], %s26
      %s28 = sshll.u32 [#allocation5], 4
      %s29 = int_to_ptr.vmem [resolvable:$true] %s28
      %34 = dma.hbm_to_vmem [thread:$0]  %s1, 3456, %s29, [#allocation6], 128, 128, 8
    $region9: #{tpu_custom_call.1} parent=1 // pred_fallthru
      _
    // Predicated region
    $region10: #{tpu_custom_call.1} parent=1 // pred_check
      _
    $region11: #{tpu_custom_call.1} parent=1 // pred_check_branch
      %36 = sbr.rel (0) target = $region13
    $region12: #{tpu_custom_call.1} parent=1 // pred_region
      _
    $region13: #{tpu_custom_call.1} parent=1 // pred_fallthru
      _
    // Predicated region
    $region14: #{tpu_custom_call.1} parent=1 // pred_check
      _
    $region15: #{tpu_custom_call.1} parent=1 // pred_check_branch
      %38 = sbr.rel (0) target = $region17
    $region16: #{tpu_custom_call.1} parent=1 // pred_region
      %39 = dma.done [#allocation3], 512
    $region17: #{tpu_custom_call.1} parent=1 // pred_fallthru
      _
    // Predicated region
    $region18: #{tpu_custom_call.1} parent=1 // pred_check
      _
    $region19: #{tpu_custom_call.1} parent=1 // pred_check_branch
      %41 = sbr.rel (0) target = $region21
    $region20: #{tpu_custom_call.1} parent=1 // pred_region
      %42 = dma.done [#allocation6], 3456
    $region21: #{tpu_custom_call.1} parent=1 // pred_fallthru
      _
    %v43 = vld [vmem:[%s2] sm:$0x1]
    %v44 = vld [vmem:[#allocation2] sm:$0xff]
    %v45 = vld [vmem:[#allocation2 + $0x8] sm:$0x3f]
    %v46 = vld [vmem:[#allocation5] sm:$0xff]
    %v47 = vld [vmem:[#allocation5 + $0x8] sm:$0xff]
    %v48 = vld [vmem:[#allocation5 + $0x10] sm:$0xff]
    %v49 = vld [vmem:[#allocation5 + $0x18] sm:$0xff]
    %v50 = vld [vmem:[#allocation5 + $0x20] sm:$0xff]
    %v51 = vld [vmem:[#allocation5 + $0x28] sm:$0xff]
    %v52 = vld [vmem:[#allocation5 + $0x30] sm:$0xff]
    %v53 = vld [vmem:[#allocation5 + $0x38] sm:$0xff]
    %v54 = vld [vmem:[#allocation5 + $0x40] sm:$0xff]
    %v55 = vld [vmem:[#allocation2 + $0x1] sm:$0xff]
    %v56 = vld [vmem:[#allocation2 + $0x9] sm:$0x3f]
    %s57 = scalar_lea.vmem [#allocation5], 72
    %v58 = vld [vmem:[%s57] sm:$0xff]
    %v59 = vld [vmem:[%s57 + $0x8] sm:$0xff]
    %v60 = vld [vmem:[%s57 + $0x10] sm:$0xff]
    %v61 = vld [vmem:[%s57 + $0x18] sm:$0xff]
    %v62 = vld [vmem:[%s57 + $0x20] sm:$0xff]
    %v63 = vld [vmem:[%s57 + $0x28] sm:$0xff]
    %v64 = vld [vmem:[%s57 + $0x30] sm:$0xff]
    %v65 = vld [vmem:[%s57 + $0x38] sm:$0xff]
    %v66 = vld [vmem:[%s57 + $0x40] sm:$0xff]
    %vm67 = vcmask 588800
    %v69 = vsel %vm67, %v55, 0
    %v72 = vsel %vm67, %v56, 0
    %74 = vmatprep.subr.mxu0 0.0
    %75 = vmatpush1.msra.mxu0 %v58
    %76 = vmatprep.subr.mxu0 0.0
    %77 = vmatpush1.msra.mxu0 %v59
    %78 = vmatprep.subr.mxu0 0.0
    %79 = vmatpush1.msra.mxu0 %v60
    %80 = vmatprep.subr.mxu0 0.0
    %81 = vmatpush1.msra.mxu0 %v61
    %82 = vmatprep.subr.mxu0 0.0
    %83 = vmatpush1.msra.mxu0 %v62
    %84 = vmatprep.subr.mxu0 0.0
    %85 = vmatpush1.msra.mxu0 %v63
    %86 = vmatprep.subr.mxu0 0.0
    %87 = vmatpush1.msra.mxu0 %v64
    %88 = vmatprep.subr.mxu0 0.0
    %89 = vmatpush1.msra.mxu0 %v65
    %90 = vmatprep.subr.mxu0 0.0
    %91 = vmatpush1.msra.mxu0 %v66
    %92 = vmatprep.subr.mxu0 0.0
    %93 = vmatpush1.msra.mxu0 0.0
    %94 = vmatprep.subr.mxu0 0.0
    %95 = vmatpush1.msra.mxu0 0.0
    %96 = vmatprep.subr.mxu0 0.0
    %97 = vmatpush1.msra.mxu0 0.0
    %98 = vmatprep.subr.mxu0 0.0
    %99 = vmatpush1.msra.mxu0 0.0
    %100 = vmatprep.subr.mxu0 0.0
    %101 = vmatpush1.msra.mxu0 0.0
    %102 = vmatprep.subr.mxu0 0.0
    %103 = vmatpush1.msra.mxu0 0.0
    %104 = vmatprep.subr.mxu0 0.0
    %105 = vmatpush1.msra.mxu0 0.0
    %106 = vmatprep.subr.mxu0 0.0
    %107 = vmatpush1.msra.mxu0 0.0
    %108 = vmatprep.subr.mxu0 0.0
    %109 = vmatpush1.msra.mxu0 0.0
    %110 = vmatprep.subr.mxu0 0.0
    %111 = vmatpush1.msra.mxu0 0.0
    %112 = vmatprep.subr.mxu0 0.0
    %113 = vmatpush1.msra.mxu0 0.0
    %114 = vmatprep.subr.mxu0 0.0
    %115 = vmatpush1.msra.mxu0 0.0
    %116 = vmatprep.subr.mxu0 0.0
    %117 = vmatpush1.msra.mxu0 0.0
    %118 = vmatprep.subr.mxu0 0.0
    %119 = vmatpush1.msra.mxu0 0.0
    %120 = vmatprep.subr.mxu0 0.0
    %121 = vmatpush1.msra.mxu0 0.0
    %122 = vmatprep.subr.mxu0 0.0
    %123 = vmatpush1.msra.mxu0 0.0
    %124 = vmatprep.subr.mxu0 0.0
    %125 = vmatpush1.msra.mxu0 0.0
    %126 = vmatprep.subr.mxu0 0.0
    %127 = vmatpush1.msra.mxu0 0.0
    %128 = vmatprep.subr.mxu0 0.0
    %129 = vmatpush1.msra.mxu0 0.0
    %130 = vmatprep.subr.mxu0 0.0
    %131 = vmatpush1.msra.mxu0 0.0
    %132 = vmatprep.subr.mxu0 0.0
    %133 = vmatpush1.msra.mxu0 0.0
    %134 = vmatprep.subr.mxu0 0.0
    %135 = vmatpush1.msra.mxu0 0.0
    %136 = vmatprep.subr.mxu0 0.0
    %137 = vmatpush1.msra.mxu0 0.0
    %138 = vmatprep.mubr.f32.mxu0 0.0
    %139 = vmatmul.mubr.f32.gmra.mrb[0].mxu0 %v69
    %v140 = vpop.f32.mrb[0].mxu0
    %v141 = vadd.f32 0.0, %v140
    %v142 = vpop.f32.mrb[0].mxu0
    %143 = vmatprep.mubr.f32.mxu0 0.0
    %144 = vmatmul.mubr.f32.gmra.mrb[0].mxu0 %v72
    %v145 = vpop.f32.mrb[0].mxu0
    %v146 = vadd.f32 0.0, %v145
    %v147 = vpop.f32.mrb[0].mxu0
    %148 = vdwg.mxu0
    %v150 = vsel %vm67, %v44, 0
    %v153 = vsel %vm67, %v45, 0
    %155 = vmatprep.subr.mxu0 0.0
    %156 = vmatpush1.msra.mxu0 %v46
    %157 = vmatprep.subr.mxu0 0.0
    %158 = vmatpush1.msra.mxu0 %v47
    %159 = vmatprep.subr.mxu0 0.0
    %160 = vmatpush1.msra.mxu0 %v48
    %161 = vmatprep.subr.mxu0 0.0
    %162 = vmatpush1.msra.mxu0 %v49
    %163 = vmatprep.subr.mxu0 0.0
    %164 = vmatpush1.msra.mxu0 %v50
    %165 = vmatprep.subr.mxu0 0.0
    %166 = vmatpush1.msra.mxu0 %v51
    %167 = vmatprep.subr.mxu0 0.0
    %168 = vmatpush1.msra.mxu0 %v52
    %169 = vmatprep.subr.mxu0 0.0
    %170 = vmatpush1.msra.mxu0 %v53
    %171 = vmatprep.subr.mxu0 0.0
    %172 = vmatpush1.msra.mxu0 %v54
    %173 = vmatprep.subr.mxu0 0.0
    %174 = vmatpush1.msra.mxu0 0.0
    %175 = vmatprep.subr.mxu0 0.0
    %176 = vmatpush1.msra.mxu0 0.0
    %177 = vmatprep.subr.mxu0 0.0
    %178 = vmatpush1.msra.mxu0 0.0
    %179 = vmatprep.subr.mxu0 0.0
    %180 = vmatpush1.msra.mxu0 0.0
    %181 = vmatprep.subr.mxu0 0.0
    %182 = vmatpush1.msra.mxu0 0.0
    %183 = vmatprep.subr.mxu0 0.0
    %184 = vmatpush1.msra.mxu0 0.0
    %185 = vmatprep.subr.mxu0 0.0
    %186 = vmatpush1.msra.mxu0 0.0
    %187 = vmatprep.subr.mxu0 0.0
    %188 = vmatpush1.msra.mxu0 0.0
    %189 = vmatprep.subr.mxu0 0.0
    %190 = vmatpush1.msra.mxu0 0.0
    %191 = vmatprep.subr.mxu0 0.0
    %192 = vmatpush1.msra.mxu0 0.0
    %193 = vmatprep.subr.mxu0 0.0
    %194 = vmatpush1.msra.mxu0 0.0
    %195 = vmatprep.subr.mxu0 0.0
    %196 = vmatpush1.msra.mxu0 0.0
    %197 = vmatprep.subr.mxu0 0.0
    %198 = vmatpush1.msra.mxu0 0.0
    %199 = vmatprep.subr.mxu0 0.0
    %200 = vmatpush1.msra.mxu0 0.0
    %201 = vmatprep.subr.mxu0 0.0
    %202 = vmatpush1.msra.mxu0 0.0
    %203 = vmatprep.subr.mxu0 0.0
    %204 = vmatpush1.msra.mxu0 0.0
    %205 = vmatprep.subr.mxu0 0.0
    %206 = vmatpush1.msra.mxu0 0.0
    %207 = vmatprep.subr.mxu0 0.0
    %208 = vmatpush1.msra.mxu0 0.0
    %209 = vmatprep.subr.mxu0 0.0
    %210 = vmatpush1.msra.mxu0 0.0
    %211 = vmatprep.subr.mxu0 0.0
    %212 = vmatpush1.msra.mxu0 0.0
    %213 = vmatprep.subr.mxu0 0.0
    %214 = vmatpush1.msra.mxu0 0.0
    %215 = vmatprep.subr.mxu0 0.0
    %216 = vmatpush1.msra.mxu0 0.0
    %217 = vmatprep.subr.mxu0 0.0
    %218 = vmatpush1.msra.mxu0 0.0
    %219 = vmatprep.mubr.f32.mxu0 0.0
    %220 = vmatmul.mubr.f32.gmra.mrb[0].mxu0 %v150
    %v221 = vpop.f32.mrb[0].mxu0
    %v222 = vadd.f32 %v141, %v221
    %v223 = vpop.f32.mrb[0].mxu0
    %224 = vmatprep.mubr.f32.mxu0 0.0
    %225 = vmatmul.mubr.f32.gmra.mrb[0].mxu0 %v153
    %v226 = vpop.f32.mrb[0].mxu0
    %v227 = vadd.f32 %v146, %v226
    %v228 = vpop.f32.mrb[0].mxu0
    %229 = vdwg.mxu0
    %v230 = vld [vmem:[#allocation2 + $0x2] sm:$0xff]
    %v231 = vld [vmem:[#allocation2 + $0xa] sm:$0x3f]
    %s232 = scalar_lea.vmem [#allocation5], 144
    %v233 = vld [vmem:[%s232] sm:$0xff]
    %v234 = vld [vmem:[%s232 + $0x8] sm:$0xff]
    %v235 = vld [vmem:[%s232 + $0x10] sm:$0xff]
    %v236 = vld [vmem:[%s232 + $0x18] sm:$0xff]
    %v237 = vld [vmem:[%s232 + $0x20] sm:$0xff]
    %v238 = vld [vmem:[%s232 + $0x28] sm:$0xff]
    %v239 = vld [vmem:[%s232 + $0x30] sm:$0xff]
    %v240 = vld [vmem:[%s232 + $0x38] sm:$0xff]
    %v241 = vld [vmem:[%s232 + $0x40] sm:$0xff]
    %v243 = vsel %vm67, %v230, 0
    %v246 = vsel %vm67, %v231, 0
    %248 = vmatprep.subr.mxu0 0.0
    %249 = vmatpush1.msra.mxu0 %v233
    %250 = vmatprep.subr.mxu0 0.0
    %251 = vmatpush1.msra.mxu0 %v234
    %252 = vmatprep.subr.mxu0 0.0
    %253 = vmatpush1.msra.mxu0 %v235
    %254 = vmatprep.subr.mxu0 0.0
    %255 = vmatpush1.msra.mxu0 %v236
    %256 = vmatprep.subr.mxu0 0.0
    %257 = vmatpush1.msra.mxu0 %v237
    %258 = vmatprep.subr.mxu0 0.0
    %259 = vmatpush1.msra.mxu0 %v238
    %260 = vmatprep.subr.mxu0 0.0
    %261 = vmatpush1.msra.mxu0 %v239
    %262 = vmatprep.subr.mxu0 0.0
    %263 = vmatpush1.msra.mxu0 %v240
    %264 = vmatprep.subr.mxu0 0.0
    %265 = vmatpush1.msra.mxu0 %v241
    %266 = vmatprep.subr.mxu0 0.0
    %267 = vmatpush1.msra.mxu0 0.0
    %268 = vmatprep.subr.mxu0 0.0
    %269 = vmatpush1.msra.mxu0 0.0
    %270 = vmatprep.subr.mxu0 0.0
    %271 = vmatpush1.msra.mxu0 0.0
    %272 = vmatprep.subr.mxu0 0.0
    %273 = vmatpush1.msra.mxu0 0.0
    %274 = vmatprep.subr.mxu0 0.0
    %275 = vmatpush1.msra.mxu0 0.0
    %276 = vmatprep.subr.mxu0 0.0
    %277 = vmatpush1.msra.mxu0 0.0
    %278 = vmatprep.subr.mxu0 0.0
    %279 = vmatpush1.msra.mxu0 0.0
    %280 = vmatprep.subr.mxu0 0.0
    %281 = vmatpush1.msra.mxu0 0.0
    %282 = vmatprep.subr.mxu0 0.0
    %283 = vmatpush1.msra.mxu0 0.0
    %284 = vmatprep.subr.mxu0 0.0
    %285 = vmatpush1.msra.mxu0 0.0
    %286 = vmatprep.subr.mxu0 0.0
    %287 = vmatpush1.msra.mxu0 0.0
    %288 = vmatprep.subr.mxu0 0.0
    %289 = vmatpush1.msra.mxu0 0.0
    %290 = vmatprep.subr.mxu0 0.0
    %291 = vmatpush1.msra.mxu0 0.0
    %292 = vmatprep.subr.mxu0 0.0
    %293 = vmatpush1.msra.mxu0 0.0
    %294 = vmatprep.subr.mxu0 0.0
    %295 = vmatpush1.msra.mxu0 0.0
    %296 = vmatprep.subr.mxu0 0.0
    %297 = vmatpush1.msra.mxu0 0.0
    %298 = vmatprep.subr.mxu0 0.0
    %299 = vmatpush1.msra.mxu0 0.0
    %300 = vmatprep.subr.mxu0 0.0
    %301 = vmatpush1.msra.mxu0 0.0
    %302 = vmatprep.subr.mxu0 0.0
    %303 = vmatpush1.msra.mxu0 0.0
    %304 = vmatprep.subr.mxu0 0.0
    %305 = vmatpush1.msra.mxu0 0.0
    %306 = vmatprep.subr.mxu0 0.0
    %307 = vmatpush1.msra.mxu0 0.0
    %308 = vmatprep.subr.mxu0 0.0
    %309 = vmatpush1.msra.mxu0 0.0
    %310 = vmatprep.subr.mxu0 0.0
    %311 = vmatpush1.msra.mxu0 0.0
    %312 = vmatprep.mubr.f32.mxu0 0.0
    %313 = vmatmul.mubr.f32.gmra.mrb[0].mxu0 %v243
    %v314 = vpop.f32.mrb[0].mxu0
    %v315 = vadd.f32 0.0, %v314
    %v316 = vpop.f32.mrb[0].mxu0
    %317 = vmatprep.mubr.f32.mxu0 0.0
    %318 = vmatmul.mubr.f32.gmra.mrb[0].mxu0 %v246
    %v319 = vpop.f32.mrb[0].mxu0
    %v320 = vadd.f32 0.0, %v319
    %v321 = vpop.f32.mrb[0].mxu0
    %322 = vdwg.mxu0
    %v323 = vadd.f32 %v222, %v315
    %v324 = vadd.f32 %v227, %v320
    %v326 = vlaneseq
    %v327 = vshrl.u32 %v326, 7
    %v328 = vsub.s32 0, %v327
    %v329 = vrot.slane %v43, %v328
    %v331 = vadd.f32 %v323, %v329
    %v332 = vadd.f32 %v324, %v329
    %333 = vst [vmem:[#allocation7] sm:$0xff] %v331
    %334 = vst [vmem:[#allocation7 + $0x8] sm:$0x3f] %v332
    %v335 = vld [vmem:[#allocation2 + $0x10] sm:$0xff]
    %v336 = vld [vmem:[#allocation2 + $0x18] sm:$0x3f]
    %v337 = vld [vmem:[#allocation5] sm:$0xff]
    %v338 = vld [vmem:[#allocation5 + $0x8] sm:$0xff]
    %v339 = vld [vmem:[#allocation5 + $0x10] sm:$0xff]
    %v340 = vld [vmem:[#allocation5 + $0x18] sm:$0xff]
    %v341 = vld [vmem:[#allocation5 + $0x20] sm:$0xff]
    %v342 = vld [vmem:[#allocation5 + $0x28] sm:$0xff]
    %v343 = vld [vmem:[#allocation5 + $0x30] sm:$0xff]
    %v344 = vld [vmem:[#allocation5 + $0x38] sm:$0xff]
    %v345 = vld [vmem:[#allocation5 + $0x40] sm:$0xff]
    %v346 = vld [vmem:[#allocation2 + $0x11] sm:$0xff]
    %v347 = vld [vmem:[#allocation2 + $0x19] sm:$0x3f]
    %v348 = vld [vmem:[%s57] sm:$0xff]
    %v349 = vld [vmem:[%s57 + $0x8] sm:$0xff]
    %v350 = vld [vmem:[%s57 + $0x10] sm:$0xff]
    %v351 = vld [vmem:[%s57 + $0x18] sm:$0xff]
    %v352 = vld [vmem:[%s57 + $0x20] sm:$0xff]
    %v353 = vld [vmem:[%s57 + $0x28] sm:$0xff]
    %v354 = vld [vmem:[%s57 + $0x30] sm:$0xff]
    %v355 = vld [vmem:[%s57 + $0x38] sm:$0xff]
    %v356 = vld [vmem:[%s57 + $0x40] sm:$0xff]
    %v358 = vsel %vm67, %v346, 0
    %v361 = vsel %vm67, %v347, 0
    %363 = vmatprep.subr.mxu0 0.0
    %364 = vmatpush1.msra.mxu0 %v348
    %365 = vmatprep.subr.mxu0 0.0
    %366 = vmatpush1.msra.mxu0 %v349
    %367 = vmatprep.subr.mxu0 0.0
    %368 = vmatpush1.msra.mxu0 %v350
    %369 = vmatprep.subr.mxu0 0.0
    %370 = vmatpush1.msra.mxu0 %v351
    %371 = vmatprep.subr.mxu0 0.0
    %372 = vmatpush1.msra.mxu0 %v352
    %373 = vmatprep.subr.mxu0 0.0
    %374 = vmatpush1.msra.mxu0 %v353
    %375 = vmatprep.subr.mxu0 0.0
    %376 = vmatpush1.msra.mxu0 %v354
    %377 = vmatprep.subr.mxu0 0.0
    %378 = vmatpush1.msra.mxu0 %v355
    %379 = vmatprep.subr.mxu0 0.0
    %380 = vmatpush1.msra.mxu0 %v356
    %381 = vmatprep.subr.mxu0 0.0
    %382 = vmatpush1.msra.mxu0 0.0
    %383 = vmatprep.subr.mxu0 0.0
    %384 = vmatpush1.msra.mxu0 0.0
    %385 = vmatprep.subr.mxu0 0.0
    %386 = vmatpush1.msra.mxu0 0.0
    %387 = vmatprep.subr.mxu0 0.0
    %388 = vmatpush1.msra.mxu0 0.0
    %389 = vmatprep.subr.mxu0 0.0
    %390 = vmatpush1.msra.mxu0 0.0
    %391 = vmatprep.subr.mxu0 0.0
    %392 = vmatpush1.msra.mxu0 0.0
    %393 = vmatprep.subr.mxu0 0.0
    %394 = vmatpush1.msra.mxu0 0.0
    %395 = vmatprep.subr.mxu0 0.0
    %396 = vmatpush1.msra.mxu0 0.0
    %397 = vmatprep.subr.mxu0 0.0
    %398 = vmatpush1.msra.mxu0 0.0
    %399 = vmatprep.subr.mxu0 0.0
    %400 = vmatpush1.msra.mxu0 0.0
    %401 = vmatprep.subr.mxu0 0.0
    %402 = vmatpush1.msra.mxu0 0.0
    %403 = vmatprep.subr.mxu0 0.0
    %404 = vmatpush1.msra.mxu0 0.0
    %405 = vmatprep.subr.mxu0 0.0
    %406 = vmatpush1.msra.mxu0 0.0
    %407 = vmatprep.subr.mxu0 0.0
    %408 = vmatpush1.msra.mxu0 0.0
    %409 = vmatprep.subr.mxu0 0.0
    %410 = vmatpush1.msra.mxu0 0.0
    %411 = vmatprep.subr.mxu0 0.0
    %412 = vmatpush1.msra.mxu0 0.0
    %413 = vmatprep.subr.mxu0 0.0
    %414 = vmatpush1.msra.mxu0 0.0
    %415 = vmatprep.subr.mxu0 0.0
    %416 = vmatpush1.msra.mxu0 0.0
    %417 = vmatprep.subr.mxu0 0.0
    %418 = vmatpush1.msra.mxu0 0.0
    %419 = vmatprep.subr.mxu0 0.0
    %420 = vmatpush1.msra.mxu0 0.0
    %421 = vmatprep.subr.mxu0 0.0
    %422 = vmatpush1.msra.mxu0 0.0
    %423 = vmatprep.subr.mxu0 0.0
    %424 = vmatpush1.msra.mxu0 0.0
    %425 = vmatprep.subr.mxu0 0.0
    %426 = vmatpush1.msra.mxu0 0.0
    %427 = vmatprep.mubr.f32.mxu0 0.0
    %428 = vmatmul.mubr.f32.gmra.mrb[0].mxu0 %v358
    %v429 = vpop.f32.mrb[0].mxu0
    %v430 = vadd.f32 0.0, %v429
    %v431 = vpop.f32.mrb[0].mxu0
    %432 = vmatprep.mubr.f32.mxu0 0.0
    %433 = vmatmul.mubr.f32.gmra.mrb[0].mxu0 %v361
    %v434 = vpop.f32.mrb[0].mxu0
    %v435 = vadd.f32 0.0, %v434
    %v436 = vpop.f32.mrb[0].mxu0
    %437 = vdwg.mxu0
    %v439 = vsel %vm67, %v335, 0
    %v442 = vsel %vm67, %v336, 0
    %444 = vmatprep.subr.mxu0 0.0
    %445 = vmatpush1.msra.mxu0 %v337
    %446 = vmatprep.subr.mxu0 0.0
    %447 = vmatpush1.msra.mxu0 %v338
    %448 = vmatprep.subr.mxu0 0.0
    %449 = vmatpush1.msra.mxu0 %v339
    %450 = vmatprep.subr.mxu0 0.0
    %451 = vmatpush1.msra.mxu0 %v340
    %452 = vmatprep.subr.mxu0 0.0
    %453 = vmatpush1.msra.mxu0 %v341
    %454 = vmatprep.subr.mxu0 0.0
    %455 = vmatpush1.msra.mxu0 %v342
    %456 = vmatprep.subr.mxu0 0.0
    %457 = vmatpush1.msra.mxu0 %v343
    %458 = vmatprep.subr.mxu0 0.0
    %459 = vmatpush1.msra.mxu0 %v344
    %460 = vmatprep.subr.mxu0 0.0
    %461 = vmatpush1.msra.mxu0 %v345
    %462 = vmatprep.subr.mxu0 0.0
    %463 = vmatpush1.msra.mxu0 0.0
    %464 = vmatprep.subr.mxu0 0.0
    %465 = vmatpush1.msra.mxu0 0.0
    %466 = vmatprep.subr.mxu0 0.0
    %467 = vmatpush1.msra.mxu0 0.0
    %468 = vmatprep.subr.mxu0 0.0
    %469 = vmatpush1.msra.mxu0 0.0
    %470 = vmatprep.subr.mxu0 0.0
    %471 = vmatpush1.msra.mxu0 0.0
    %472 = vmatprep.subr.mxu0 0.0
    %473 = vmatpush1.msra.mxu0 0.0
    %474 = vmatprep.subr.mxu0 0.0
    %475 = vmatpush1.msra.mxu0 0.0
    %476 = vmatprep.subr.mxu0 0.0
    %477 = vmatpush1.msra.mxu0 0.0
    %478 = vmatprep.subr.mxu0 0.0
    %479 = vmatpush1.msra.mxu0 0.0
    %480 = vmatprep.subr.mxu0 0.0
    %481 = vmatpush1.msra.mxu0 0.0
    %482 = vmatprep.subr.mxu0 0.0
    %483 = vmatpush1.msra.mxu0 0.0
    %484 = vmatprep.subr.mxu0 0.0
    %485 = vmatpush1.msra.mxu0 0.0
    %486 = vmatprep.subr.mxu0 0.0
    %487 = vmatpush1.msra.mxu0 0.0
    %488 = vmatprep.subr.mxu0 0.0
    %489 = vmatpush1.msra.mxu0 0.0
    %490 = vmatprep.subr.mxu0 0.0
    %491 = vmatpush1.msra.mxu0 0.0
    %492 = vmatprep.subr.mxu0 0.0
    %493 = vmatpush1.msra.mxu0 0.0
    %494 = vmatprep.subr.mxu0 0.0
    %495 = vmatpush1.msra.mxu0 0.0
    %496 = vmatprep.subr.mxu0 0.0
    %497 = vmatpush1.msra.mxu0 0.0
    %498 = vmatprep.subr.mxu0 0.0
    %499 = vmatpush1.msra.mxu0 0.0
    %500 = vmatprep.subr.mxu0 0.0
    %501 = vmatpush1.msra.mxu0 0.0
    %502 = vmatprep.subr.mxu0 0.0
    %503 = vmatpush1.msra.mxu0 0.0
    %504 = vmatprep.subr.mxu0 0.0
    %505 = vmatpush1.msra.mxu0 0.0
    %506 = vmatprep.subr.mxu0 0.0
    %507 = vmatpush1.msra.mxu0 0.0
    %508 = vmatprep.mubr.f32.mxu0 0.0
    %509 = vmatmul.mubr.f32.gmra.mrb[0].mxu0 %v439
    %v510 = vpop.f32.mrb[0].mxu0
    %v511 = vadd.f32 %v430, %v510
    %v512 = vpop.f32.mrb[0].mxu0
    %513 = vmatprep.mubr.f32.mxu0 0.0
    %514 = vmatmul.mubr.f32.gmra.mrb[0].mxu0 %v442
    %v515 = vpop.f32.mrb[0].mxu0
    %v516 = vadd.f32 %v435, %v515
    %v517 = vpop.f32.mrb[0].mxu0
    %518 = vdwg.mxu0
    %v519 = vld [vmem:[#allocation2 + $0x12] sm:$0xff]
    %v520 = vld [vmem:[#allocation2 + $0x1a] sm:$0x3f]
    %v521 = vld [vmem:[%s232] sm:$0xff]
    %v522 = vld [vmem:[%s232 + $0x8] sm:$0xff]
    %v523 = vld [vmem:[%s232 + $0x10] sm:$0xff]
    %v524 = vld [vmem:[%s232 + $0x18] sm:$0xff]
    %v525 = vld [vmem:[%s232 + $0x20] sm:$0xff]
    %v526 = vld [vmem:[%s232 + $0x28] sm:$0xff]
    %v527 = vld [vmem:[%s232 + $0x30] sm:$0xff]
    %v528 = vld [vmem:[%s232 + $0x38] sm:$0xff]
    %v529 = vld [vmem:[%s232 + $0x40] sm:$0xff]
    %v531 = vsel %vm67, %v519, 0
    %v534 = vsel %vm67, %v520, 0
    %536 = vmatprep.subr.mxu0 0.0
    %537 = vmatpush1.msra.mxu0 %v521
    %538 = vmatprep.subr.mxu0 0.0
    %539 = vmatpush1.msra.mxu0 %v522
    %540 = vmatprep.subr.mxu0 0.0
    %541 = vmatpush1.msra.mxu0 %v523
    %542 = vmatprep.subr.mxu0 0.0
    %543 = vmatpush1.msra.mxu0 %v524
    %544 = vmatprep.subr.mxu0 0.0
    %545 = vmatpush1.msra.mxu0 %v525
    %546 = vmatprep.subr.mxu0 0.0
    %547 = vmatpush1.msra.mxu0 %v526
    %548 = vmatprep.subr.mxu0 0.0
    %549 = vmatpush1.msra.mxu0 %v527
    %550 = vmatprep.subr.mxu0 0.0
    %551 = vmatpush1.msra.mxu0 %v528
    %552 = vmatprep.subr.mxu0 0.0
    %553 = vmatpush1.msra.mxu0 %v529
    %554 = vmatprep.subr.mxu0 0.0
    %555 = vmatpush1.msra.mxu0 0.0
    %556 = vmatprep.subr.mxu0 0.0
    %557 = vmatpush1.msra.mxu0 0.0
    %558 = vmatprep.subr.mxu0 0.0
    %559 = vmatpush1.msra.mxu0 0.0
    %560 = vmatprep.subr.mxu0 0.0
    %561 = vmatpush1.msra.mxu0 0.0
    %562 = vmatprep.subr.mxu0 0.0
    %563 = vmatpush1.msra.mxu0 0.0
    %564 = vmatprep.subr.mxu0 0.0
    %565 = vmatpush1.msra.mxu0 0.0
    %566 = vmatprep.subr.mxu0 0.0
    %567 = vmatpush1.msra.mxu0 0.0
    %568 = vmatprep.subr.mxu0 0.0
    %569 = vmatpush1.msra.mxu0 0.0
    %570 = vmatprep.subr.mxu0 0.0
    %571 = vmatpush1.msra.mxu0 0.0
    %572 = vmatprep.subr.mxu0 0.0
    %573 = vmatpush1.msra.mxu0 0.0
    %574 = vmatprep.subr.mxu0 0.0
    %575 = vmatpush1.msra.mxu0 0.0
    %576 = vmatprep.subr.mxu0 0.0
    %577 = vmatpush1.msra.mxu0 0.0
    %578 = vmatprep.subr.mxu0 0.0
    %579 = vmatpush1.msra.mxu0 0.0
    %580 = vmatprep.subr.mxu0 0.0
    %581 = vmatpush1.msra.mxu0 0.0
    %582 = vmatprep.subr.mxu0 0.0
    %583 = vmatpush1.msra.mxu0 0.0
    %584 = vmatprep.subr.mxu0 0.0
    %585 = vmatpush1.msra.mxu0 0.0
    %586 = vmatprep.subr.mxu0 0.0
    %587 = vmatpush1.msra.mxu0 0.0
    %588 = vmatprep.subr.mxu0 0.0
    %589 = vmatpush1.msra.mxu0 0.0
    %590 = vmatprep.subr.mxu0 0.0
    %591 = vmatpush1.msra.mxu0 0.0
    %592 = vmatprep.subr.mxu0 0.0
    %593 = vmatpush1.msra.mxu0 0.0
    %594 = vmatprep.subr.mxu0 0.0
    %595 = vmatpush1.msra.mxu0 0.0
    %596 = vmatprep.subr.mxu0 0.0
    %597 = vmatpush1.msra.mxu0 0.0
    %598 = vmatprep.subr.mxu0 0.0
    %599 = vmatpush1.msra.mxu0 0.0
    %600 = vmatprep.mubr.f32.mxu0 0.0
    %601 = vmatmul.mubr.f32.gmra.mrb[0].mxu0 %v531
    %v602 = vpop.f32.mrb[0].mxu0
    %v603 = vadd.f32 0.0, %v602
    %v604 = vpop.f32.mrb[0].mxu0
    %605 = vmatprep.mubr.f32.mxu0 0.0
    %606 = vmatmul.mubr.f32.gmra.mrb[0].mxu0 %v534
    %v607 = vpop.f32.mrb[0].mxu0
    %v608 = vadd.f32 0.0, %v607
    %v609 = vpop.f32.mrb[0].mxu0
    %610 = vdwg.mxu0
    %v611 = vadd.f32 %v511, %v603
    %v612 = vadd.f32 %v516, %v608
    %v613 = vadd.f32 %v611, %v329
    %v614 = vadd.f32 %v612, %v329
    %615 = vst [vmem:[#allocation7 + $0xe] sm:$0xff] %v613
    %616 = vst [vmem:[#allocation7 + $0x16] sm:$0x3f] %v614
    // Predicated region
    $region22: #{tpu_custom_call.1} parent=1 // pred_check
      _
    $region23: #{tpu_custom_call.1} parent=1 // pred_check_branch
      %618 = sbr.rel (0) target = $region25
    $region24: #{tpu_custom_call.1} parent=1 // pred_region
      %s620 = ssub.s32 512, 512
      %621 = vsyncadd [#allocation4], %s620
      %s622 = sshll.u32 [#allocation7], 4
      %s623 = int_to_ptr.vmem [resolvable:$true] %s622
      %628 = dma.vmem_to_hbm [thread:$0]  %s623, 512, %s3, [#allocation4], 128, 128, 8
    $region25: #{tpu_custom_call.1} parent=1 // pred_fallthru
      _
    // Predicated region
    $region26: #{tpu_custom_call.1} parent=1 // pred_check
      _
    $region27: #{tpu_custom_call.1} parent=1 // pred_check_branch
      %630 = sbr.rel (0) target = $region29
    $region28: #{tpu_custom_call.1} parent=1 // pred_region
      %631 = dma.done [#allocation4], 512
    $region29: #{tpu_custom_call.1} parent=1 // pred_fallthru
      _
    %632 = vsyncpa [#allocation3], 1
    %633 = vsyncpa [#allocation6], 1
    %634 = vsyncpa [#allocation4], 1

</llo_original>
